<compile_context>
chip_gen: v7x
topology: tpu7x:2x2x1
jax: 0.10.0
libtpu: 0.0.40
codegen_flags: <defaults>
</compile_context>

<pallas_src>
import functools

import jax
import jax.numpy as jnp
from jax.experimental import pallas as pl
from jax.experimental.pallas import tpu as pltpu

BN_EPS = 1e-5
# Explicit scoped-VMEM budget: fits every generation (v5e/v6e 128 MiB, v7x 64 MiB phys).
_VMEM_LIMIT = 32 * 1024 * 1024


# ---------------------------------------------------------------------------
# Kernel 1: 1x1 conv as matmul + BN phase-1 statistics (sum / sum-of-squares).
#   grid = (N,): one image per step; stats accumulate across the grid ("arbitrary").
# ---------------------------------------------------------------------------
def _conv1_stats_kernel(x_ref, w_ref, y_ref, sum_ref, sq_ref):
    # x_ref: (1, HW, Cin), w_ref: (Cin, M) bf16, y_ref: (1, HW, M)
    y = jnp.dot(x_ref[0].astype(jnp.bfloat16), w_ref[...],
                preferred_element_type=jnp.float32)          # (HW, M) f32
    y_ref[0] = y

    @pl.when(pl.program_id(0) == 0)
    def _():
        sum_ref[...] = jnp.zeros_like(sum_ref)
        sq_ref[...] = jnp.zeros_like(sq_ref)

    sum_ref[...] += jnp.sum(y, axis=0, keepdims=True)
    sq_ref[...] += jnp.sum(y * y, axis=0, keepdims=True)


def conv1x1_stats(x3, w1_bf16):
    N, HW, Cin = x3.shape
    M = w1_bf16.shape[1]
    return pl.pallas_call(
        _conv1_stats_kernel,
        out_shape=(jax.ShapeDtypeStruct((N, HW, M), jnp.float32),
                   jax.ShapeDtypeStruct((1, M), jnp.float32),
                   jax.ShapeDtypeStruct((1, M), jnp.float32)),
        grid=(N,),
        in_specs=[pl.BlockSpec((1, HW, Cin), lambda n: (n, 0, 0)),
                  pl.BlockSpec((Cin, M), lambda n: (0, 0))],
        out_specs=(pl.BlockSpec((1, HW, M), lambda n: (n, 0, 0)),
                   pl.BlockSpec((1, M), lambda n: (0, 0)),
                   pl.BlockSpec((1, M), lambda n: (0, 0))),
        compiler_params=pltpu.CompilerParams(
            dimension_semantics=("arbitrary",),
            vmem_limit_bytes=_VMEM_LIMIT),
    )(x3, w1_bf16)


# ---------------------------------------------------------------------------
# Kernel 2: BN-apply + nearest-upsample(H) + sigmoid attention + fusion.
#   Attention logits are VPU multiply + lane reduce (2 outputs => no 2-wide matmul).
# ---------------------------------------------------------------------------
def _bn_att_fuse_kernel(y1_ref, yres_ref, w_ref, b_ref, sum_ref, sq_ref,
                        gamma_ref, beta_ref, o_ref, *, inv_count, fh):
    mean = sum_ref[...] * inv_count                          # (1, M)
    var = jnp.maximum(sq_ref[...] * inv_count - mean * mean, 0.0)
    scale = gamma_ref[...] * jax.lax.rsqrt(var + BN_EPS)
    shift = beta_ref[...] - mean * scale

    x = y1_ref[0] * scale + shift                            # (H, W, M)

    ysrc = yres_ref[0]                                       # (hp, W, M) hp = H // fh
    hp, W, M = ysrc.shape
    y = jnp.broadcast_to(ysrc[:, None, :, :], (hp, fh, W, M)).reshape(hp * fh, W, M)

    l0 = (jnp.sum(x * w_ref[0:1, :], axis=-1, keepdims=True)
          + jnp.sum(y * w_ref[2:3, :], axis=-1, keepdims=True) + b_ref[0])
    l1 = (jnp.sum(x * w_ref[1:2, :], axis=-1, keepdims=True)
          + jnp.sum(y * w_ref[3:4, :], axis=-1, keepdims=True) + b_ref[1])
    z0 = jax.nn.sigmoid(l0)                                  # (H, W, 1)
    z1 = jax.nn.sigmoid(l1)

    o_ref[0] = (x * z0 + y * z1).astype(o_ref.dtype)


def bn_att_fuse(y1_nhwm, y_w, w4, att_b, s, q, gamma, beta, inv_count, fh):
    N, H, W, M = y1_nhwm.shape
    hp = y_w.shape[1]
    kern = functools.partial(_bn_att_fuse_kernel, inv_count=inv_count, fh=fh)
    return pl.pallas_call(
        kern,
        out_shape=jax.ShapeDtypeStruct((N, H, W, M), jnp.float32),
        grid=(N,),
        in_specs=[pl.BlockSpec((1, H, W, M), lambda n: (n, 0, 0, 0)),
                  pl.BlockSpec((1, hp, W, M), lambda n: (n, 0, 0, 0)),
                  pl.BlockSpec((4, M), lambda n: (0, 0)),
                  pl.BlockSpec(memory_space=pltpu.MemorySpace.SMEM),
                  pl.BlockSpec((1, M), lambda n: (0, 0)),
                  pl.BlockSpec((1, M), lambda n: (0, 0)),
                  pl.BlockSpec((1, M), lambda n: (0, 0)),
                  pl.BlockSpec((1, M), lambda n: (0, 0))],
        out_specs=pl.BlockSpec((1, H, W, M), lambda n: (n, 0, 0, 0)),
        compiler_params=pltpu.CompilerParams(
            dimension_semantics=("parallel",),
            vmem_limit_bytes=_VMEM_LIMIT),
    )(y1_nhwm, y_w, w4, att_b, s, q, gamma, beta)


# ---------------------------------------------------------------------------
# Kernel 3: 3x3 conv (pad=1, stride=1) on a per-image padded raster band.
#   The padded image is flattened to ((H+2)*(W+2)+2, C); each of the 9 taps is a
#   contiguous static row-slice at offset dh*(W+2)+dw, so the conv is 9 plain 2-D
#   matmuls accumulated in f32 -- no im2col tensor ever touches HBM.
#   Per-channel sum / sum-sq are accumulated with the pad columns masked out.
# ---------------------------------------------------------------------------
def _conv3_band_stats_kernel(x_ref, w_ref, y_ref, sum_ref, sq_ref, *, wp, lb, valid_w):
    cout = y_ref.shape[-1]
    acc = jnp.zeros((lb, cout), jnp.float32)
    t = 0
    for dh in range(3):
        for dw in range(3):
            start = dh * wp + dw
            acc = acc + jnp.dot(x_ref[0, start:start + lb, :].astype(jnp.bfloat16),
                                w_ref[t], preferred_element_type=jnp.float32)
            t += 1
    y_ref[0] = acc

    # Band row i corresponds to raster column (i mod wp); valid output columns are
    # 1..valid_w (the rest are the zero-pad columns and must not bias the BN stats).
    col = jax.lax.broadcasted_iota(jnp.int32, (lb, 1), 0) % wp
    mask = jnp.where(jnp.logical_and(col >= 1, col <= valid_w), 1.0, 0.0)

    @pl.when(pl.program_id(0) == 0)
    def _():
        sum_ref[...] = jnp.zeros_like(sum_ref)
        sq_ref[...] = jnp.zeros_like(sq_ref)

    masked = acc * mask
    sum_ref[...] += jnp.sum(masked, axis=0, keepdims=True)
    sq_ref[...] += jnp.sum(masked * acc, axis=0, keepdims=True)


def conv3x3_band_stats(xbuf, w2_bf16, lb, wp, valid_w, cout):
    N, rows, M = xbuf.shape
    kern = functools.partial(_conv3_band_stats_kernel, wp=wp, lb=lb, valid_w=valid_w)
    return pl.pallas_call(
        kern,
        out_shape=(jax.ShapeDtypeStruct((N, lb, cout), jnp.float32),
                   jax.ShapeDtypeStruct((1, cout), jnp.float32),
                   jax.ShapeDtypeStruct((1, cout), jnp.float32)),
        grid=(N,),
        in_specs=[pl.BlockSpec((1, rows, M), lambda n: (n, 0, 0)),
                  pl.BlockSpec((9, M, cout), lambda n: (0, 0, 0))],
        out_specs=(pl.BlockSpec((1, lb, cout), lambda n: (n, 0, 0)),
                   pl.BlockSpec((1, cout), lambda n: (0, 0)),
                   pl.BlockSpec((1, cout), lambda n: (0, 0))),
        compiler_params=pltpu.CompilerParams(
            dimension_semantics=("arbitrary",),
            vmem_limit_bytes=_VMEM_LIMIT),
    )(xbuf, w2_bf16)


# ---------------------------------------------------------------------------
# Kernel 4: BatchNorm phase-2 (apply normalization + affine), tiled, parallel.
# ---------------------------------------------------------------------------
def _bn_apply_kernel(y_ref, sum_ref, sq_ref, gamma_ref, beta_ref, o_ref, *, inv_count):
    mean = sum_ref[...] * inv_count
    var = jnp.maximum(sq_ref[...] * inv_count - mean * mean, 0.0)
    scale = gamma_ref[...] * jax.lax.rsqrt(var + BN_EPS)
    shift = beta_ref[...] - mean * scale
    o_ref[0] = (y_ref[0] * scale + shift).astype(o_ref.dtype)


def bn_apply(y3, s, q, gamma, beta, inv_count):
    N, R, C = y3.shape
    kern = functools.partial(_bn_apply_kernel, inv_count=inv_count)
    return pl.pallas_call(
        kern,
        out_shape=jax.ShapeDtypeStruct((N, R, C), jnp.float32),
        grid=(N,),
        in_specs=[pl.BlockSpec((1, R, C), lambda n: (n, 0, 0)),
                  pl.BlockSpec((1, C), lambda n: (0, 0)),
                  pl.BlockSpec((1, C), lambda n: (0, 0)),
                  pl.BlockSpec((1, C), lambda n: (0, 0)),
                  pl.BlockSpec((1, C), lambda n: (0, 0))],
        out_specs=pl.BlockSpec((1, R, C), lambda n: (n, 0, 0)),
        compiler_params=pltpu.CompilerParams(
            dimension_semantics=("parallel",),
            vmem_limit_bytes=_VMEM_LIMIT),
    )(y3, s, q, gamma, beta)


# ---------------------------------------------------------------------------
# Glue (data movement only; all compute above).
# ---------------------------------------------------------------------------
def _prepare_resized_y(yres, H, W):
    """W-axis nearest upsample in glue (half-resolution tensor only); H-axis handled
    inside the attention kernel.  Matches F.interpolate(mode='nearest')."""
    N, hp, wp_, M = yres.shape
    if H % hp == 0 and W % wp_ == 0:
        fw = W // wp_
        y_w = jnp.repeat(yres, fw, axis=2) if fw > 1 else yres
        return y_w, H // hp
    # General (non-integer factor) fallback: src = floor(dst * in / out).
    rows = (jnp.arange(H) * hp) // H
    cols = (jnp.arange(W) * wp_) // W
    return yres[:, rows][:, :, cols], 1


def abf_forward(p, x_nhwc, y_nhwc=None):
    N, H, W, Cin = x_nhwc.shape
    M = p["bn1_gamma"].shape[0]
    Cout = p["bn2_gamma"].shape[0]
    HW = H * W
    inv_cnt = 1.0 / float(N * HW)

    # ---- conv1 (1x1) + BN phase 1 ----
    x3 = x_nhwc.reshape(N, HW, Cin)
    w1 = p["conv1_w"][:, :, 0, 0].T.astype(jnp.bfloat16)          # (Cin, M)
    y1, s1, q1 = conv1x1_stats(x3, w1)
    g1 = p["bn1_gamma"].reshape(1, M)
    b1 = p["bn1_beta"].reshape(1, M)

    # ---- BN phase 2 (+ attention fusion) ----
    if p["att_w"] is not None:
        y_w, fh = _prepare_resized_y(y_nhwc, H, W)
        Watt = p["att_w"][:, :, 0, 0]                             # (2, 2M)
        w4 = jnp.concatenate([Watt[:, :M], Watt[:, M:]], axis=0)  # (4, M)
        xmid = bn_att_fuse(y1.reshape(N, H, W, M), y_w, w4, p["att_b"],
                           s1, q1, g1, b1, inv_cnt, fh)           # (N, H, W, M)
    else:
        xmid = bn_apply(y1, s1, q1, g1, b1, inv_cnt).reshape(N, H, W, M)

    # ---- conv2 (3x3, pad=1) + BN ----
    Wp = W + 2
    Mr = (H + 2) * Wp
    LB = H * Wp
    xr = jnp.pad(xmid, ((0, 0), (1, 1), (1, 1), (0, 0)))           # spatial zero-pad
    xbuf = jnp.pad(xr.reshape(N, Mr, M), ((0, 0), (1, 1), (0, 0))) # raster guard rows
    w2 = jnp.transpose(p["conv2_w"], (2, 3, 1, 0)).reshape(9, M, Cout).astype(jnp.bfloat16)
    yb, s2, q2 = conv3x3_band_stats(xbuf, w2, LB, Wp, W, Cout)
    g2 = p["bn2_gamma"].reshape(1, Cout)
    b2 = p["bn2_beta"].reshape(1, Cout)
    out_band = bn_apply(yb, s2, q2, g2, b2, inv_cnt)               # (N, LB, Cout)
    out = out_band.reshape(N, H, Wp, Cout)[:, :, 1:W + 1, :]       # drop pad columns
    return out, xmid


def init_student_trans_params(key, in_channels, out_channels, mid_channel):
    L = len(in_channels)
    params = []
    for i, cin in enumerate(in_channels):
        cout = out_channels[i]
        fuse = i < L - 1
        key, k1, k2, k3, k4 = jax.random.split(key, 5)
        b1 = (3.0 / cin) ** 0.5                         # kaiming_uniform(a=1), fan_in=cin
        b2 = (3.0 / (mid_channel * 9)) ** 0.5
        p = dict(
            conv1_w=jax.random.uniform(k1, (mid_channel, cin, 1, 1), jnp.float32, -b1, b1),
            bn1_gamma=jnp.ones((mid_channel,), jnp.float32),
            bn1_beta=jnp.zeros((mid_channel,), jnp.float32),
            conv2_w=jax.random.uniform(k2, (cout, mid_channel, 3, 3), jnp.float32, -b2, b2),
            bn2_gamma=jnp.ones((cout,), jnp.float32),
            bn2_beta=jnp.zeros((cout,), jnp.float32),
            att_w=None, att_b=None,
        )
        if fuse:
            fan_in = 2 * mid_channel
            ba = (1.0 / fan_in) ** 0.5
            p["att_w"] = jax.random.uniform(k3, (2, 2 * mid_channel, 1, 1),
                                            jnp.float32, -ba, ba)
            p["att_b"] = jax.random.uniform(k4, (2,), jnp.float32, -ba, ba)
        params.append(p)
    return params[::-1]                                 # mirrors self.abfs = abfs[::-1]


def student_trans_forward(params_rev, student_features_nchw):
    feats = [jnp.transpose(f, (0, 2, 3, 1)) for f in student_features_nchw]  # NCHW->NHWC
    x = feats[::-1]
    results = []
    out, res = abf_forward(params_rev[0], x[0])
    results.append(out)
    for feat, p in zip(x[1:], params_rev[1:]):
        out, res = abf_forward(p, feat, res)
        results.insert(0, out)
    return [jnp.transpose(r, (0, 3, 1, 2)) for r in results]                 # back to NCHW


if __name__ == "__main__":
    key = jax.random.PRNGKey(0)
    in_channels = [4, 8, 16]
    out_channels = [8, 8, 8]
    mid_channel = 8
    N = 2
    spatial = [16, 8, 4]

    kp, kx = jax.random.split(key)
    params = init_student_trans_params(kp, in_channels, out_channels, mid_channel)

    feats = []
    for c, s in zip(in_channels, spatial):
        kx, kf = jax.random.split(kx)
        feats.append(jax.random.normal(kf, (N, c, s, s), jnp.float32))

    results = student_trans_forward(params, feats)
    results = jax.block_until_ready(results)

    for r, c_out, s in zip(results, out_channels, spatial):
        assert r.shape == (N, c_out, s, s), r.shape
        assert jnp.all(jnp.isfinite(r))
    print("KERNEL_OK")
</pallas_src>

<mosaic_0001>
module attributes {stable_mosaic.version = 11 : i64} {
  func.func @_conv1_stats_kernel(%arg0: i32, %arg1: memref<1x16x16xf32, #tpu.memory_space<vmem>>, %arg2: memref<16x8xbf16, #tpu.memory_space<vmem>>, %arg3: memref<1x16x8xf32, #tpu.memory_space<vmem>>, %arg4: memref<1x8xf32, #tpu.memory_space<vmem>>, %arg5: memref<1x8xf32, #tpu.memory_space<vmem>>) attributes {dimension_semantics = [#tpu.dimension_semantics<arbitrary>], iteration_bounds = array<i64: 2>, scalar_prefetch = 0 : i64, scratch_operands = 0 : i64, tpu.core_type = #tpu.core_type<tc>, window_params = [{transform_indices = @transform_0, window_bounds = array<i64: 1, 16, 16>}, {pipeline_mode = #tpu.pipeline_mode<synchronous>, transform_indices = @transform_1, window_bounds = array<i64: 16, 8>}, {transform_indices = @transform_2, window_bounds = array<i64: 1, 16, 8>}, {pipeline_mode = #tpu.pipeline_mode<synchronous>, transform_indices = @transform_3, window_bounds = array<i64: 1, 8>}, {pipeline_mode = #tpu.pipeline_mode<synchronous>, transform_indices = @transform_4, window_bounds = array<i64: 1, 8>}]} {
    %c0 = arith.constant 0 : index
    %c0_0 = arith.constant 0 : index
    %c0_1 = arith.constant 0 : index
    %0 = vector.load %arg1[%c0, %c0_0, %c0_1] : memref<1x16x16xf32, #tpu.memory_space<vmem>>, vector<1x16x16xf32>
    %1 = vector.shape_cast %0 : vector<1x16x16xf32> to vector<16x16xf32>
    %2 = arith.truncf %1 : vector<16x16xf32> to vector<16x16xbf16>
    %c0_2 = arith.constant 0 : index
    %c0_3 = arith.constant 0 : index
    %3 = vector.load %arg2[%c0_2, %c0_3] : memref<16x8xbf16, #tpu.memory_space<vmem>>, vector<16x8xbf16>
    %cst = arith.constant dense<0.000000e+00> : vector<16x8xf32>
    %4 = tpu.matmul %2, %3, %cst {dimension_numbers = #tpu.dot_dimension_numbers<[1], [0], [0], [1], [0, 0, 1, 1], [], []>} : vector<16x16xbf16>, vector<16x8xbf16>, vector<16x8xf32> -> vector<16x8xf32>
    %c0_4 = arith.constant 0 : index
    %c0_5 = arith.constant 0 : index
    %c0_6 = arith.constant 0 : index
    %5 = vector.load %arg3[%c0_4, %c0_5, %c0_6] : memref<1x16x8xf32, #tpu.memory_space<vmem>>, vector<1x16x8xf32>
    %6 = vector.shape_cast %5 : vector<1x16x8xf32> to vector<16x8xf32>
    %7 = vector.shape_cast %4 : vector<16x8xf32> to vector<1x16x8xf32>
    tpu.vector_store %arg3[%c0_4, %c0_5, %c0_6], %7 {strides = array<i32>} : memref<1x16x8xf32, #tpu.memory_space<vmem>>, vector<1x16x8xf32>,
    %c0_i32 = arith.constant 0 : i32
    %8 = arith.cmpi eq, %arg0, %c0_i32 : i32
    %9 = arith.extui %8 : i1 to i32
    %c0_i32_7 = arith.constant 0 : i32
    %10 = arith.cmpi ne, %9, %c0_i32_7 : i32
    scf.if %10 {
      %cst_18 = arith.constant 0.000000e+00 : f32
      %22 = vector.broadcast %cst_18 : f32 to vector<1x8xf32>
      %c0_19 = arith.constant 0 : index
      %c0_20 = arith.constant 0 : index
      %23 = vector.load %arg4[%c0_19, %c0_20] : memref<1x8xf32, #tpu.memory_space<vmem>>, vector<1x8xf32>
      tpu.vector_store %arg4[%c0_19, %c0_20], %22 {strides = array<i32>} : memref<1x8xf32, #tpu.memory_space<vmem>>, vector<1x8xf32>,
      %cst_21 = arith.constant 0.000000e+00 : f32
      %24 = vector.broadcast %cst_21 : f32 to vector<1x8xf32>
      %c0_22 = arith.constant 0 : index
      %c0_23 = arith.constant 0 : index
      %25 = vector.load %arg5[%c0_22, %c0_23] : memref<1x8xf32, #tpu.memory_space<vmem>>, vector<1x8xf32>
      tpu.vector_store %arg5[%c0_22, %c0_23], %24 {strides = array<i32>} : memref<1x8xf32, #tpu.memory_space<vmem>>, vector<1x8xf32>,
    } else {
    }
    %c0_8 = arith.constant 0 : index
    %c0_9 = arith.constant 0 : index
    %11 = vector.load %arg4[%c0_8, %c0_9] : memref<1x8xf32, #tpu.memory_space<vmem>>, vector<1x8xf32>
    %cst_10 = arith.constant dense<0.000000e+00> : vector<8xf32>
    %12 = vector.multi_reduction <add>, %4, %cst_10 [0] : vector<16x8xf32> to vector<8xf32>
    %13 = vector.shape_cast %12 : vector<8xf32> to vector<1x8xf32>
    %14 = arith.addf %11, %13 : vector<1x8xf32>
    %c0_11 = arith.constant 0 : index
    %c0_12 = arith.constant 0 : index
    %15 = vector.load %arg4[%c0_11, %c0_12] : memref<1x8xf32, #tpu.memory_space<vmem>>, vector<1x8xf32>
    tpu.vector_store %arg4[%c0_11, %c0_12], %14 {strides = array<i32>} : memref<1x8xf32, #tpu.memory_space<vmem>>, vector<1x8xf32>,
    %c0_13 = arith.constant 0 : index
    %c0_14 = arith.constant 0 : index
    %16 = vector.load %arg5[%c0_13, %c0_14] : memref<1x8xf32, #tpu.memory_space<vmem>>, vector<1x8xf32>
    %17 = arith.mulf %4, %4 : vector<16x8xf32>
    %cst_15 = arith.constant dense<0.000000e+00> : vector<8xf32>
    %18 = vector.multi_reduction <add>, %17, %cst_15 [0] : vector<16x8xf32> to vector<8xf32>
    %19 = vector.shape_cast %18 : vector<8xf32> to vector<1x8xf32>
    %20 = arith.addf %16, %19 : vector<1x8xf32>
    %c0_16 = arith.constant 0 : index
    %c0_17 = arith.constant 0 : index
    %21 = vector.load %arg5[%c0_16, %c0_17] : memref<1x8xf32, #tpu.memory_space<vmem>>, vector<1x8xf32>
    tpu.vector_store %arg5[%c0_16, %c0_17], %20 {strides = array<i32>} : memref<1x8xf32, #tpu.memory_space<vmem>>, vector<1x8xf32>,
    return
  }
  func.func @transform_0(%arg0: i32) -> (i32, i32, i32) {
    %c0_i32 = arith.constant 0 : i32
    %c0_i32_0 = arith.constant 0 : i32
    %c0_i32_1 = arith.constant 0 : i32
    return %arg0, %c0_i32, %c0_i32_0 : i32, i32, i32
  }
  func.func @transform_1(%arg0: i32) -> (i32, i32) {
    %c0_i32 = arith.constant 0 : i32
    %c0_i32_0 = arith.constant 0 : i32
    %c0_i32_1 = arith.constant 0 : i32
    return %c0_i32, %c0_i32_0 : i32, i32
  }
  func.func @transform_2(%arg0: i32) -> (i32, i32, i32) {
    %c0_i32 = arith.constant 0 : i32
    %c0_i32_0 = arith.constant 0 : i32
    %c0_i32_1 = arith.constant 0 : i32
    return %arg0, %c0_i32, %c0_i32_0 : i32, i32, i32
  }
  func.func @transform_3(%arg0: i32) -> (i32, i32) {
    %c0_i32 = arith.constant 0 : i32
    %c0_i32_0 = arith.constant 0 : i32
    %c0_i32_1 = arith.constant 0 : i32
    return %c0_i32, %c0_i32_0 : i32, i32
  }
  func.func @transform_4(%arg0: i32) -> (i32, i32) {
    %c0_i32 = arith.constant 0 : i32
    %c0_i32_0 = arith.constant 0 : i32
    %c0_i32_1 = arith.constant 0 : i32
    return %c0_i32, %c0_i32_0 : i32, i32
  }
}

</mosaic_0001>

<llo_original>
// kernel: tpu_custom_call.1
$region0: #{tpu_custom_call.1}
  #allocation0 [shape = 'u32[]', space=smem, size = 0x4, offset = 0x4, fixed_abs, tag = 'smem constant byte address 0x4 - core index']
  #allocation1 [shape = 'u32[144,128]{1,0:T(1,128)}', space=vmem, size = 0x12000, scoped, tag = 'internal scratch']
  %s0 = inlined_call_operand.hbm [shape: f32[2,16,16], index: 0, kind: input, shape index: {}]
  %s1 = inlined_call_operand.vmem [shape: bf16[16,8], index: 1, kind: input, shape index: {}]
  %s2 = inlined_call_operand.vmem [shape: f32[2,16,8], index: 2, kind: output, shape index: {0}]
  %s3 = inlined_call_operand.hbm [shape: f32[1,8], index: 3, kind: output, shape index: {1}]
  %s4 = inlined_call_operand.hbm [shape: f32[1,8], index: 4, kind: output, shape index: {2}]
  %5 = xla_tuple %s2, %s3, %s4
  %s6 = sld [smem:[#allocation0]]
  $region65: #{tpu_custom_call.1} parent=0
    _
  %s8 = ssub.s32 1, %s6
  %s9 = scalar_select 0, %s8, %s6
  $region1: #{tpu_custom_call.1} parent=0
    #allocation2 [shape = 'u8[16384]{0}', space=vmem, size = 0x4000, scoped, tag = 'input window, operand 0']
    #allocation3 [shape = 's32[2]{0}', space=sflag, size = 0x8, scoped, tag = 'scoped memory for tpu_custom_call.1']
    #allocation4 [shape = 's32[2]{0}', space=sflag, size = 0x8, scoped, tag = 'scoped memory for tpu_custom_call.1']
    #allocation5 [shape = 'u8[512]{0}', space=vmem, size = 0x400, scoped, tag = 'output window, operand 1, single buffered']
    #allocation6 [shape = 'u8[512]{0}', space=vmem, size = 0x400, scoped, tag = 'output window, operand 2, single buffered']
    #allocation7 [shape = 's32[1]{0}', space=sflag, size = 0x4, scoped, tag = 'scoped memory for tpu_custom_call.1']
    %10 = vsyncpa [#allocation3], 0
    %s11 = scalar_lea.sflag [#allocation3], 1
    %12 = vsyncpa %s11, 0
    %13 = vsyncpa [#allocation4], 0
    %14 = vsyncpa [#allocation7], 0
    loop: start=0, step=1, limit=4
    $region2: #{tpu_custom_call.1} parent=1 // loop_pre_header
      _
    $region3: #{tpu_custom_call.1} parent=1 // loop_header
      %s16 = sphi 0, %s20
      %p17 = scmp.ge.s32.totalorder %s16, 4
      %s26 = sphi 0, %s28
      %s29 = sphi 0, %s26
      %s30 = sphi 0, %s29
      %s46 = sphi 0, %s30
      %s50 = sphi 0, %s50
      %s52 = sphi 0, %s50
      %s53 = sphi 0, %s52
      %s67 = sphi 0, %s53
      %s73 = sphi 0, %s75
      %s76 = sphi 0, %s73
      %s77 = sphi 0, %s76
      %s93 = sphi 0, %s77
      %s97 = sphi 0, %s97
      %s99 = sphi 0, %s97
      %s100 = sphi 0, %s99
      %s114 = sphi 0, %s100
      %s118 = sphi 0, %s118
      %s120 = sphi 0, %s118
      %s121 = sphi 0, %s120
      %s135 = sphi 0, %s121
    $region4: #{tpu_custom_call.1} parent=1 // loop_header_branch
      %19 = sbr.rel (%p17) target = $region8
    $region5: #{tpu_custom_call.1} parent=1 // loop_body
      %s21 = ssub.s32 %s16, 1
      %s22 = ssub.s32 %s16, 2
      %s23 = sadd.s32 %s16, 1
      %s24 = ssub.s32 %s16, %s23
      %p25 = scmp.eq.s32.totalorder %s24, 0
      %s27 = sadd.s32 %s26, 1
      %s28 = scalar_select %p25, %s26, %s27
      %p31 = pneg %p25
      %p32 = scmp.eq.s32.totalorder %s16, 1
      %p33 = por %p31, %p32
      %p34 = scmp.ne.s32.totalorder %s26, %s29
      %p35 = scmp.eq.s32.totalorder %s16, 0
      %p36 = por %p34, %p35
      %p37 = scmp.ne.s32.totalorder %s26, %s29
      %p38 = scmp.eq.s32.totalorder %s21, 1
      %p39 = por %p37, %p38
      %p40 = scmp.ne.s32.totalorder %s29, %s30
      %p41 = scmp.eq.s32.totalorder %s21, 0
      %p42 = por %p40, %p41
      %p43 = scmp.ne.s32.totalorder %s29, %s30
      %p44 = scmp.eq.s32.totalorder %s22, 1
      %p45 = por %p43, %p44
      %p47 = scmp.ne.s32.totalorder %s30, %s46
      %p48 = scmp.eq.s32.totalorder %s22, 0
      %p49 = por %p47, %p48
      %s51 = sadd.s32 %s50, 1
      %p54 = scmp.eq.s32.totalorder %s16, 1
      %p55 = scmp.ne.s32.totalorder %s50, %s52
      %p56 = scmp.eq.s32.totalorder %s16, 0
      %p57 = por %p55, %p56
      %p58 = scmp.ne.s32.totalorder %s50, %s52
      %p59 = scmp.eq.s32.totalorder %s21, 1
      %p60 = por %p58, %p59
      %p61 = scmp.ne.s32.totalorder %s52, %s53
      %p62 = scmp.eq.s32.totalorder %s21, 0
      %p63 = por %p61, %p62
      %p64 = scmp.ne.s32.totalorder %s52, %s53
      %p65 = scmp.eq.s32.totalorder %s22, 1
      %p66 = por %p64, %p65
      %p68 = scmp.ne.s32.totalorder %s53, %s67
      %p69 = scmp.eq.s32.totalorder %s22, 0
      %p70 = por %p68, %p69
      %s71 = ssub.s32 %s16, %s23
      %p72 = scmp.eq.s32.totalorder %s71, 0
      %s74 = sadd.s32 %s73, 1
      %s75 = scalar_select %p72, %s73, %s74
      %p78 = pneg %p72
      %p79 = scmp.eq.s32.totalorder %s16, 1
      %p80 = por %p78, %p79
      %p81 = scmp.ne.s32.totalorder %s73, %s76
      %p82 = scmp.eq.s32.totalorder %s16, 0
      %p83 = por %p81, %p82
      %p84 = scmp.ne.s32.totalorder %s73, %s76
      %p85 = scmp.eq.s32.totalorder %s21, 1
      %p86 = por %p84, %p85
      %p87 = scmp.ne.s32.totalorder %s76, %s77
      %p88 = scmp.eq.s32.totalorder %s21, 0
      %p89 = por %p87, %p88
      %p90 = scmp.ne.s32.totalorder %s76, %s77
      %p91 = scmp.eq.s32.totalorder %s22, 1
      %p92 = por %p90, %p91
      %p94 = scmp.ne.s32.totalorder %s77, %s93
      %p95 = scmp.eq.s32.totalorder %s22, 0
      %p96 = por %p94, %p95
      %s98 = sadd.s32 %s97, 1
      %p101 = scmp.eq.s32.totalorder %s16, 1
      %p102 = scmp.ne.s32.totalorder %s97, %s99
      %p103 = scmp.eq.s32.totalorder %s16, 0
      %p104 = por %p102, %p103
      %p105 = scmp.ne.s32.totalorder %s97, %s99
      %p106 = scmp.eq.s32.totalorder %s21, 1
      %p107 = por %p105, %p106
      %p108 = scmp.ne.s32.totalorder %s99, %s100
      %p109 = scmp.eq.s32.totalorder %s21, 0
      %p110 = por %p108, %p109
      %p111 = scmp.ne.s32.totalorder %s99, %s100
      %p112 = scmp.eq.s32.totalorder %s22, 1
      %p113 = por %p111, %p112
      %p115 = scmp.ne.s32.totalorder %s100, %s114
      %p116 = scmp.eq.s32.totalorder %s22, 0
      %p117 = por %p115, %p116
      %s119 = sadd.s32 %s118, 1
      %p122 = scmp.eq.s32.totalorder %s16, 1
      %p123 = scmp.ne.s32.totalorder %s118, %s120
      %p124 = scmp.eq.s32.totalorder %s16, 0
      %p125 = por %p123, %p124
      %p126 = scmp.ne.s32.totalorder %s118, %s120
      %p127 = scmp.eq.s32.totalorder %s21, 1
      %p128 = por %p126, %p127
      %p129 = scmp.ne.s32.totalorder %s120, %s121
      %p130 = scmp.eq.s32.totalorder %s21, 0
      %p131 = por %p129, %p130
      %p132 = scmp.ne.s32.totalorder %s120, %s121
      %p133 = scmp.eq.s32.totalorder %s22, 1
      %p134 = por %p132, %p133
      %p136 = scmp.ne.s32.totalorder %s121, %s135
      %p137 = scmp.eq.s32.totalorder %s22, 0
      %p138 = por %p136, %p137
      %p139 = scmp.le.s32.totalorder 1, %s16
      %p140 = scmp.lt.s32.totalorder %s16, 3
      %p141 = pnand %p139, %p140
      %p142 = pneg %p141
      // Predicated region
      $region9: #{tpu_custom_call.1} parent=5 // pred_check
        _
      $region10: #{tpu_custom_call.1} parent=5 // pred_check_branch
        %144 = sbr.rel (%p141) target = $region12
      $region11: #{tpu_custom_call.1} parent=5 // pred_region
        %s145 = ssub.s32 %s16, 1
        // Predicated region
        $region13: #{tpu_custom_call.1} parent=11 // pred_check
          %p146 = pneg %p63
        $region14: #{tpu_custom_call.1} parent=11 // pred_check_branch
          %148 = sbr.rel (%p146) target = $region16
        $region15: #{tpu_custom_call.1} parent=11 // pred_region
          _
        $region16: #{tpu_custom_call.1} parent=11 // pred_fallthru
          _
      $region12: #{tpu_custom_call.1} parent=5 // pred_fallthru
        _
      %p149 = scmp.lt.s32.totalorder %s16, 2
      // Predicated region
      $region17: #{tpu_custom_call.1} parent=5 // pred_check
        %p150 = pneg %p149
      $region18: #{tpu_custom_call.1} parent=5 // pred_check_branch
        %152 = sbr.rel (%p150) target = $region20
      $region19: #{tpu_custom_call.1} parent=5 // pred_region
        // Predicated region
        $region21: #{tpu_custom_call.1} parent=19 // pred_check
          %p153 = pneg %p36
        $region22: #{tpu_custom_call.1} parent=19 // pred_check_branch
          %155 = sbr.rel (%p153) target = $region24
        $region23: #{tpu_custom_call.1} parent=19 // pred_region
          %s156 = sand.u32 %s26, 1
          %s157 = scalar_lea.sflag [#allocation3], %s156
          %s158 = sand.u32 %s26, 1
          %s159 = smul.addr %s158, 16
          %s160 = scalar_lea.vmem [#allocation2], %s159
          %s162 = ssub.s32 256, 256
          %163 = vsyncadd %s157, %s162
          %s164 = smul.addr %s16, 2
          %s165 = smul.addr %s164, 128
          %s166 = scalar_lea.hbm %s0, %s165
          %s167 = sshll.u32 %s160, 4
          %s168 = int_to_ptr.vmem [resolvable:$true] %s167
          %173 = dma.hbm_to_vmem [thread:$0]  %s166, 256, %s168, %s157, 128, 128, 8
        $region24: #{tpu_custom_call.1} parent=19 // pred_fallthru
          _
      $region20: #{tpu_custom_call.1} parent=5 // pred_fallthru
        _
      %p174 = scmp.le.s32.totalorder 1, %s16
      %p175 = scmp.lt.s32.totalorder %s16, 3
      %p176 = pnand %p174, %p175
      %p177 = pneg %p176
      // Predicated region
      $region25: #{tpu_custom_call.1} parent=5 // pred_check
        _
      $region26: #{tpu_custom_call.1} parent=5 // pred_check_branch
        %179 = sbr.rel (%p176) target = $region28
      $region27: #{tpu_custom_call.1} parent=5 // pred_region
        %s180 = ssub.s32 %s16, 1
        %s181 = sand.u32 %s29, 1
        %s182 = scalar_lea.sflag [#allocation3], %s181
        %s183 = sand.u32 %s29, 1
        %s184 = smul.addr %s183, 16
        %s185 = scalar_lea.vmem [#allocation2], %s184
        // Predicated region
        $region29: #{tpu_custom_call.1} parent=27 // pred_check
          %p186 = pneg %p42
        $region30: #{tpu_custom_call.1} parent=27 // pred_check_branch
          %188 = sbr.rel (%p186) target = $region32
        $region31: #{tpu_custom_call.1} parent=27 // pred_region
          %189 = dma.done %s182, 256
        $region32: #{tpu_custom_call.1} parent=27 // pred_fallthru
          _
        %s190 = sand.u32 %s29, 1
        %s191 = scalar_lea.sflag [#allocation3], %s190
        %s192 = sand.u32 %s29, 1
        %s193 = smul.addr %s192, 16
        %s194 = scalar_lea.vmem [#allocation2], %s193
        %p195 = pneg %p42
        %p196 = pneg %p39
        %p197 = pneg %p63
        %p198 = pneg %p60
        %p199 = pneg %p89
        %p200 = pneg %p86
        %p201 = scmp.lt.s32.totalorder %s21, 1
        %s202 = scalar_select %p201, %s21, 1
        %s203 = smul.addr %s202, 2
        %s204 = smul.addr %s203, 8
        %s205 = scalar_lea.vmem %s2, %s204
        %p206 = pneg %p110
        %p207 = pneg %p107
        %p208 = pneg %p131
        %p209 = pneg %p128
        %p210 = scmp.lt.s32.totalorder %s21, 1
        %s211 = scalar_select %p210, %s21, 1
        %s212 = smul.addr %s211, 2
        %s213 = smul.addr %s212, 8
        %s214 = scalar_lea.vmem %s2, %s213
        %v216 = vld [vmem:[%s185] sm:$0xff]
        %v217 = vld [vmem:[%s185 + $0x8] sm:$0xff]
        %v218 = vpack.c.bf16 %v217, %v216
        %v219 = vld [vmem:[%s1] sm:$0xf]
        %v220 = vld [vmem:[%s1 + $0x4] sm:$0xf]
        %v223 = vunpack.c.l.b16 %v219
        %v224 = vunpack.c.l.b16 %v220
        %v225 = vpack.c.b16 %v224, %v223
        %vm227 = vcmask 130048
        %v229 = vsel %vm227, %v218, 0
        %231 = vmatprep.subr.bf16.mxu0 0
        %232 = vmatpush1.bf16.msra.mxu0 %v225
        %233 = vmatprep.subr.bf16.mxu0 0
        %234 = vmatpush1.bf16.msra.mxu0 0
        %235 = vmatprep.subr.bf16.mxu0 0
        %236 = vmatpush1.bf16.msra.mxu0 0
        %237 = vmatprep.subr.bf16.mxu0 0
        %238 = vmatpush1.bf16.msra.mxu0 0
        %239 = vmatprep.subr.bf16.mxu0 0
        %240 = vmatpush1.bf16.msra.mxu0 0
        %241 = vmatprep.subr.bf16.mxu0 0
        %242 = vmatpush1.bf16.msra.mxu0 0
        %243 = vmatprep.subr.bf16.mxu0 0
        %244 = vmatpush1.bf16.msra.mxu0 0
        %245 = vmatprep.subr.bf16.mxu0 0
        %246 = vmatpush1.bf16.msra.mxu0 0
        %247 = vmatprep.subr.bf16.mxu0 0
        %248 = vmatpush1.bf16.msra.mxu0 0
        %249 = vmatprep.subr.bf16.mxu0 0
        %250 = vmatpush1.bf16.msra.mxu0 0
        %251 = vmatprep.subr.bf16.mxu0 0
        %252 = vmatpush1.bf16.msra.mxu0 0
        %253 = vmatprep.subr.bf16.mxu0 0
        %254 = vmatpush1.bf16.msra.mxu0 0
        %255 = vmatprep.subr.bf16.mxu0 0
        %256 = vmatpush1.bf16.msra.mxu0 0
        %257 = vmatprep.subr.bf16.mxu0 0
        %258 = vmatpush1.bf16.msra.mxu0 0
        %259 = vmatprep.subr.bf16.mxu0 0
        %260 = vmatpush1.bf16.msra.mxu0 0
        %261 = vmatprep.subr.bf16.mxu0 0
        %262 = vmatpush1.bf16.msra.mxu0 0
        %263 = vmatprep.mubr.bf16.mxu0 0
        %264 = vmatmul.mubr.bf16.gmra.mrb[0].mxu0 %v229
        %v265 = vpop.f32.mrb[0].mxu0
        %v266 = vadd.f32 0.0, %v265
        %v267 = vpop.f32.mrb[0].mxu0
        %v268 = vpop.f32.mrb[0].mxu0
        %v269 = vadd.f32 0.0, %v268
        %v270 = vpop.f32.mrb[0].mxu0
        %271 = vdwg.mxu0
        %vm272 = vcmask 64512
        %273 = vst.msk [vmem:[%s214] sm:$0xff] %vm272, %v266
        %274 = vst.msk [vmem:[%s214 + $0x8] sm:$0xff] %vm272, %v269
        %p275 = scmp.eq.s32.totalorder %s21, 0
        // Predicated region
        $region33: #{tpu_custom_call.1} parent=27 // pred_check
          %p276 = pneg %p275
        $region34: #{tpu_custom_call.1} parent=27 // pred_check_branch
          %278 = sbr.rel (%p276) target = $region36
        $region35: #{tpu_custom_call.1} parent=27 // pred_region
          %vm279 = vcmask 57344
          %280 = vst.msk [vmem:[#allocation5] sm:$0x1] %vm279, 0.0
          %281 = vst.msk [vmem:[#allocation6] sm:$0x1] %vm279, 0.0
        $region36: #{tpu_custom_call.1} parent=27 // pred_fallthru
          _
        %v282 = vld [vmem:[#allocation5] sm:$0x1]
        %v283 = vsel %vm272, %v266, 0.0
        %v284 = vsel %vm272, %v269, 0.0
        %v285 = vadd.f32 %v283, %v284
        %v286 = vrot.slane %v285, 4
        %v287 = vadd.f32 %v285, %v286
        %v288 = vrot.slane %v287, 2
        %v289 = vadd.f32 %v287, %v288
        %v290 = vrot.slane %v289, 1
        %v291 = vadd.f32 %v289, %v290
        %v292 = vadd.f32 %v282, %v291
        %vm293 = vcmask 57344
        %294 = vst.msk [vmem:[#allocation5] sm:$0x1] %vm293, %v292
        %v295 = vld [vmem:[#allocation6] sm:$0x1]
        %v296 = vmul.f32 %v266, %v266
        %v297 = vmul.f32 %v269, %v269
        %v298 = vsel %vm272, %v296, 0.0
        %v299 = vsel %vm272, %v297, 0.0
        %v300 = vadd.f32 %v298, %v299
        %v301 = vrot.slane %v300, 4
        %v302 = vadd.f32 %v300, %v301
        %v303 = vrot.slane %v302, 2
        %v304 = vadd.f32 %v302, %v303
        %v305 = vrot.slane %v304, 1
        %v306 = vadd.f32 %v304, %v305
        %v307 = vadd.f32 %v295, %v306
        %308 = vst.msk [vmem:[#allocation6] sm:$0x1] %vm293, %v307
        %p309 = scmp.lt.s32.totalorder %s21, 1
        %s310 = scalar_select %p309, %s21, 1
        %s311 = smul.addr %s310, 2
        %s312 = smul.addr %s311, 8
        %s313 = scalar_lea.vmem %s2, %s312
        // Predicated region
        $region37: #{tpu_custom_call.1} parent=27 // pred_check
          %p314 = pneg %p86
        $region38: #{tpu_custom_call.1} parent=27 // pred_check_branch
          %316 = sbr.rel (%p314) target = $region40
        $region39: #{tpu_custom_call.1} parent=27 // pred_region
          _
        $region40: #{tpu_custom_call.1} parent=27 // pred_fallthru
          _
        // Predicated region
        $region41: #{tpu_custom_call.1} parent=27 // pred_check
          %p317 = pneg %p107
        $region42: #{tpu_custom_call.1} parent=27 // pred_check_branch
          %319 = sbr.rel (%p317) target = $region44
        $region43: #{tpu_custom_call.1} parent=27 // pred_region
          %s321 = ssub.s32 16, 16
          %322 = vsyncadd [#allocation4], %s321
          %s324 = sshll.u32 [#allocation5], 4
          %s325 = int_to_ptr.vmem [resolvable:$true] %s324
          %327 = dma.vmem_to_hbm [thread:$0]  %s325, 16, %s3, [#allocation4]
        $region44: #{tpu_custom_call.1} parent=27 // pred_fallthru
          _
        // Predicated region
        $region45: #{tpu_custom_call.1} parent=27 // pred_check
          %p328 = pneg %p128
        $region46: #{tpu_custom_call.1} parent=27 // pred_check_branch
          %330 = sbr.rel (%p328) target = $region48
        $region47: #{tpu_custom_call.1} parent=27 // pred_region
          %s332 = ssub.s32 16, 16
          %333 = vsyncadd [#allocation7], %s332
          %s335 = sshll.u32 [#allocation6], 4
          %s336 = int_to_ptr.vmem [resolvable:$true] %s335
          %338 = dma.vmem_to_hbm [thread:$0]  %s336, 16, %s4, [#allocation7]
        $region48: #{tpu_custom_call.1} parent=27 // pred_fallthru
          _
        // Predicated region
        $region49: #{tpu_custom_call.1} parent=27 // pred_check
          %p339 = pneg %p107
        $region50: #{tpu_custom_call.1} parent=27 // pred_check_branch
          %341 = sbr.rel (%p339) target = $region52
        $region51: #{tpu_custom_call.1} parent=27 // pred_region
          %342 = dma.done [#allocation4], 16
        $region52: #{tpu_custom_call.1} parent=27 // pred_fallthru
          _
        // Predicated region
        $region53: #{tpu_custom_call.1} parent=27 // pred_check
          %p343 = pneg %p128
        $region54: #{tpu_custom_call.1} parent=27 // pred_check_branch
          %345 = sbr.rel (%p343) target = $region56
        $region55: #{tpu_custom_call.1} parent=27 // pred_region
          %346 = dma.done [#allocation7], 16
        $region56: #{tpu_custom_call.1} parent=27 // pred_fallthru
          _
      $region28: #{tpu_custom_call.1} parent=5 // pred_fallthru
        _
      %p347 = scmp.le.s32.totalorder 2, %s16
      // Predicated region
      $region57: #{tpu_custom_call.1} parent=5 // pred_check
        %p348 = pneg %p347
      $region58: #{tpu_custom_call.1} parent=5 // pred_check_branch
        %350 = sbr.rel (%p348) target = $region60
      $region59: #{tpu_custom_call.1} parent=5 // pred_region
        %s351 = ssub.s32 %s16, 2
        // Predicated region
        $region61: #{tpu_custom_call.1} parent=59 // pred_check
          %p352 = pneg %p92
        $region62: #{tpu_custom_call.1} parent=59 // pred_check_branch
          %354 = sbr.rel (%p352) target = $region64
        $region63: #{tpu_custom_call.1} parent=59 // pred_region
          %p355 = scmp.lt.s32.totalorder %s22, 1
          %s356 = scalar_select %p355, %s22, 1
          %s357 = smul.addr %s356, 2
          %s358 = smul.addr %s357, 8
          %s359 = scalar_lea.vmem %s2, %s358
        $region64: #{tpu_custom_call.1} parent=59 // pred_fallthru
          _
      $region60: #{tpu_custom_call.1} parent=5 // pred_fallthru
        _
    $region6: #{tpu_custom_call.1} parent=1 // loop_footer
      %s20 = sadd.s32 1, %s16
    $region7: #{tpu_custom_call.1} parent=1 // loop_footer_branch
      %15 = sbr.rel target = $region3
    $region8: #{tpu_custom_call.1} parent=1 // loop_exit
      _
    %360 = vsyncpa [#allocation3], 1
    %s361 = scalar_lea.sflag [#allocation3], 1
    %362 = vsyncpa %s361, 1
    %363 = vsyncpa [#allocation4], 1
    %s364 = scalar_lea.sflag [#allocation4], 1
    %365 = vsyncpa %s364, 1
    %366 = vsyncpa [#allocation7], 1

</llo_original>
